<compile_context>
chip_gen: v7x
topology: tpu7x:2x2x1
jax: 0.10.0
libtpu: 0.0.40
codegen_flags: <defaults>
</compile_context>

<pallas_src>
import jax
import jax.numpy as jnp
from jax.experimental import pallas as pl
from jax.experimental.pallas import tpu as pltpu

LANE = 128      # TPU vreg lane width  -> pad the output feature dim to this
SUBLANE = 8     # TPU vreg sublane height -> pad the batch dim to a multiple


def dummy_policy_kernel(x_ref, wt_ref, b_ref, y_ref):
    # Entire problem fits in single VMEM blocks (shapes are tiny).
    x = x_ref[...]                                   # (Bp, nx)
    wt = wt_ref[...]                                 # (nx, 128)  pre-transposed, zero-padded
    b = b_ref[...]                                   # (1, 128)   zero-padded bias row
    y = jnp.dot(x, wt, preferred_element_type=jnp.float32) + b   # (Bp, 128), f32 acc
    y_ref[...] = y.astype(y_ref.dtype)               # one lane-dense, unmasked store
    # TODO(synk): any downstream epilogue (exp(log_std), action sampling via
    # pltpu.prng_seed/prng_random_bits, tanh squash) would fuse here for free in
    # the EUP/VALU slots, but the reference module's forward ends at (mu, log_std).


def init_dummy_policy_params(key, nx, nu, dtype=jnp.float32):
    """nn.Linear(nx, 2*nu) init (uniform +/- 1/sqrt(nx)).

    Returns:
      wt_pad : (nx, 128)  weight, pre-transposed and zero-padded along lanes
      b_pad  : (1, 128)   bias row, zero-padded along lanes
      weight : (2*nu, nx) torch-layout weight  (reference checking only)
      bias   : (2*nu,)    torch-layout bias    (reference checking only)
    """
    k_w, k_b = jax.random.split(key)
    bound = 1.0 / jnp.sqrt(nx)
    two_nu = 2 * nu
    weight = jax.random.uniform(k_w, (two_nu, nx), dtype, -bound, bound)
    bias = jax.random.uniform(k_b, (two_nu,), dtype, -bound, bound)
    # Transpose + lane-pad ONCE at init; the hot path never pays for it.
    wt_pad = jnp.zeros((nx, LANE), dtype).at[:, :two_nu].set(weight.T)
    b_pad = jnp.zeros((1, LANE), dtype).at[0, :two_nu].set(bias)
    return wt_pad, b_pad, weight, bias


def dummy_policy_forward(x, wt_pad, b_pad, nu):
    """x: (B, nx); wt_pad: (nx, 128); b_pad: (1, 128). Returns (mu, log_std), each (B, nu)."""
    B, _ = x.shape
    two_nu = 2 * nu

    # Sublane-dense batch (no-op when B is already a multiple of 8).
    Bp = ((B + SUBLANE - 1) // SUBLANE) * SUBLANE
    x_p = x if Bp == B else jnp.pad(x, ((0, Bp - B), (0, 0)))

    y = pl.pallas_call(
        dummy_policy_kernel,
        out_shape=jax.ShapeDtypeStruct((Bp, LANE), x.dtype),
        in_specs=[
            pl.BlockSpec(memory_space=pltpu.MemorySpace.VMEM),   # x
            pl.BlockSpec(memory_space=pltpu.MemorySpace.VMEM),   # padded weight^T
            pl.BlockSpec(memory_space=pltpu.MemorySpace.VMEM),   # padded bias row
        ],
        out_specs=pl.BlockSpec(memory_space=pltpu.MemorySpace.VMEM),
    )(x_p, wt_pad, b_pad)

    # chunk(2, dim=-1) equivalent — cheap XLA slice of the lane-dense slab,
    # kept outside the kernel (lane-8 boundary is not tile-aligned).
    return y[:B, :nu], y[:B, nu:two_nu]


# TODO(synk): if batch / feature sizes grow, add a B grid axis marked "parallel"
# (dual TC on v7x), keep wt index_map -> (0, 0) so the weight stays resident in
# VMEM, cast x/wt to bf16 with f32 accumulation and 256-aligned tiles on
# v6e/v7x (128-aligned + f32 epilogue on v5e), and re-derive the B tile for
# v7x's 64 MiB VMEM with an explicit vmem_limit_bytes.

if __name__ == "__main__":
    nx, nu, batch = 32, 8, 8   # B = 8 -> full sublane height, no masked rows

    key = jax.random.PRNGKey(0)
    k_x, k_params = jax.random.split(key)

    wt_pad, b_pad, weight, bias = init_dummy_policy_params(k_params, nx, nu)
    x = jax.random.normal(k_x, (batch, nx), jnp.float32)

    fwd = jax.jit(dummy_policy_forward, static_argnums=(3,))
    mu, log_std = fwd(x, wt_pad, b_pad, nu)
    jax.block_until_ready((mu, log_std))

    # Reference check against plain JAX (same semantics as the PyTorch forward).
    y_ref = x @ weight.T + bias
    mu_ref, ls_ref = y_ref[:, :nu], y_ref[:, nu:]
    assert mu.shape == (batch, nu) and log_std.shape == (batch, nu)
    assert jnp.allclose(mu, mu_ref, atol=1e-5)
    assert jnp.allclose(log_std, ls_ref, atol=1e-5)

    print("KERNEL_OK")
</pallas_src>

<mosaic_0001>
module attributes {stable_mosaic.version = 11 : i64} {
  func.func @dummy_policy_kernel(%arg0: memref<8x32xf32, #tpu.memory_space<vmem>>, %arg1: memref<32x128xf32, #tpu.memory_space<vmem>>, %arg2: memref<1x128xf32, #tpu.memory_space<vmem>>, %arg3: memref<8x128xf32, #tpu.memory_space<vmem>>) attributes {dimension_semantics = [], scalar_prefetch = 0 : i64, scratch_operands = 0 : i64, tpu.core_type = #tpu.core_type<tc>} {
    %c0 = arith.constant 0 : index
    %c0_0 = arith.constant 0 : index
    %0 = vector.load %arg0[%c0, %c0_0] : memref<8x32xf32, #tpu.memory_space<vmem>>, vector<8x32xf32>
    %c0_1 = arith.constant 0 : index
    %c0_2 = arith.constant 0 : index
    %1 = vector.load %arg1[%c0_1, %c0_2] : memref<32x128xf32, #tpu.memory_space<vmem>>, vector<32x128xf32>
    %c0_3 = arith.constant 0 : index
    %c0_4 = arith.constant 0 : index
    %2 = vector.load %arg2[%c0_3, %c0_4] : memref<1x128xf32, #tpu.memory_space<vmem>>, vector<1x128xf32>
    %cst = arith.constant dense<0.000000e+00> : vector<8x128xf32>
    %3 = tpu.matmul %0, %1, %cst {dimension_numbers = #tpu.dot_dimension_numbers<[1], [0], [0], [1], [0, 0, 1, 1], [], []>} : vector<8x32xf32>, vector<32x128xf32>, vector<8x128xf32> -> vector<8x128xf32>
    %4 = vector.broadcast %2 : vector<1x128xf32> to vector<8x128xf32>
    %5 = arith.addf %3, %4 : vector<8x128xf32>
    %c0_5 = arith.constant 0 : index
    %c0_6 = arith.constant 0 : index
    %6 = vector.load %arg3[%c0_5, %c0_6] : memref<8x128xf32, #tpu.memory_space<vmem>>, vector<8x128xf32>
    tpu.vector_store %arg3[%c0_5, %c0_6], %5 {strides = array<i32>} : memref<8x128xf32, #tpu.memory_space<vmem>>, vector<8x128xf32>,
    return
  }
}

</mosaic_0001>

<llo_original>
// kernel: dummy_policy_forward.1
$region0: #{dummy_policy_forward.1}
  #allocation0 [shape = 'u32[]', space=smem, size = 0x4, offset = 0x4, fixed_abs, tag = 'smem constant byte address 0x4 - core index']
  #allocation1 [shape = 'u32[144,128]{1,0:T(1,128)}', space=vmem, size = 0x12000, scoped, tag = 'internal scratch']
  %s0 = inlined_call_operand.hbm [shape: f32[8,32], index: 0, kind: input, shape index: {}]
  %s1 = inlined_call_operand.hbm [shape: f32[32,128], index: 1, kind: input, shape index: {}]
  %s2 = inlined_call_operand.vmem [shape: f32[1,128], index: 2, kind: input, shape index: {}]
  %s3 = inlined_call_operand.vmem [shape: f32[8,128], index: 3, kind: output, shape index: {}]
  %s4 = sld [smem:[#allocation0]]
  $region30: #{dummy_policy_forward.1} parent=0
    _
  %s6 = ssub.s32 1, %s4
  %s7 = scalar_select 0, %s6, %s4
  $region1: #{dummy_policy_forward.1} parent=0
    #allocation2 [shape = 'u8[4096]{0}', space=vmem, size = 0x1000, scoped, tag = 'input window, operand 0, single buffered']
    #allocation3 [shape = 's32[1]{0}', space=sflag, size = 0x4, scoped, tag = 'scoped memory for dummy_policy_forward.1']
    #allocation4 [shape = 'u8[16384]{0}', space=vmem, size = 0x4000, scoped, tag = 'input window, operand 1, single buffered']
    #allocation5 [shape = 's32[1]{0}', space=sflag, size = 0x4, scoped, tag = 'scoped memory for dummy_policy_forward.1']
    %8 = vsyncpa [#allocation3], 0
    %9 = vsyncpa [#allocation5], 0
    // Predicated region
    $region2: #{dummy_policy_forward.1} parent=1 // pred_check
      _
    $region3: #{dummy_policy_forward.1} parent=1 // pred_check_branch
      %11 = sbr.rel (0) target = $region5
    $region4: #{dummy_policy_forward.1} parent=1 // pred_region
      %s13 = ssub.s32 128, 128
      %14 = vsyncadd [#allocation3], %s13
      %s16 = sshll.u32 [#allocation2], 4
      %s17 = int_to_ptr.vmem [resolvable:$true] %s16
      %19 = dma.hbm_to_vmem [thread:$0]  %s0, 128, %s17, [#allocation3]
    $region5: #{dummy_policy_forward.1} parent=1 // pred_fallthru
      _
    // Predicated region
    $region6: #{dummy_policy_forward.1} parent=1 // pred_check
      _
    $region7: #{dummy_policy_forward.1} parent=1 // pred_check_branch
      %21 = sbr.rel (0) target = $region9
    $region8: #{dummy_policy_forward.1} parent=1 // pred_region
      %s23 = ssub.s32 512, 512
      %24 = vsyncadd [#allocation5], %s23
      %s25 = sshll.u32 [#allocation4], 4
      %s26 = int_to_ptr.vmem [resolvable:$true] %s25
      %31 = dma.hbm_to_vmem [thread:$0]  %s1, 512, %s26, [#allocation5], 128, 128, 8
    $region9: #{dummy_policy_forward.1} parent=1 // pred_fallthru
      _
    // Predicated region
    $region10: #{dummy_policy_forward.1} parent=1 // pred_check
      _
    $region11: #{dummy_policy_forward.1} parent=1 // pred_check_branch
      %33 = sbr.rel (0) target = $region13
    $region12: #{dummy_policy_forward.1} parent=1 // pred_region
      _
    $region13: #{dummy_policy_forward.1} parent=1 // pred_fallthru
      _
    // Predicated region
    $region14: #{dummy_policy_forward.1} parent=1 // pred_check
      _
    $region15: #{dummy_policy_forward.1} parent=1 // pred_check_branch
      %35 = sbr.rel (0) target = $region17
    $region16: #{dummy_policy_forward.1} parent=1 // pred_region
      %36 = dma.done [#allocation3], 128
    $region17: #{dummy_policy_forward.1} parent=1 // pred_fallthru
      _
    // Predicated region
    $region18: #{dummy_policy_forward.1} parent=1 // pred_check
      _
    $region19: #{dummy_policy_forward.1} parent=1 // pred_check_branch
      %38 = sbr.rel (0) target = $region21
    $region20: #{dummy_policy_forward.1} parent=1 // pred_region
      %39 = dma.done [#allocation5], 512
    $region21: #{dummy_policy_forward.1} parent=1 // pred_fallthru
      _
    %v40 = vld [vmem:[#allocation2] sm:$0xff]
    %v41 = vld [vmem:[#allocation4] sm:$0xff]
    %v42 = vld [vmem:[#allocation4 + $0x8] sm:$0xff]
    %v43 = vld [vmem:[#allocation4 + $0x10] sm:$0xff]
    %v44 = vld [vmem:[#allocation4 + $0x18] sm:$0xff]
    %v45 = vld [vmem:[%s2] sm:$0x1]
    %v47 = vlaneseq
    %v48 = vshrl.u32 %v47, 7
    %v49 = vsub.s32 0, %v48
    %v50 = vrot.slane %v45, %v49
    %vm52 = vcmask 261120
    %v54 = vsel %vm52, %v40, 0
    %56 = vmatprep.subr.mxu0 0.0
    %57 = vmatpush1.msra.mxu0 %v41
    %58 = vmatprep.subr.mxu0 0.0
    %59 = vmatpush1.msra.mxu0 %v42
    %60 = vmatprep.subr.mxu0 0.0
    %61 = vmatpush1.msra.mxu0 %v43
    %62 = vmatprep.subr.mxu0 0.0
    %63 = vmatpush1.msra.mxu0 %v44
    %64 = vmatprep.subr.mxu0 0.0
    %65 = vmatpush1.msra.mxu0 0.0
    %66 = vmatprep.subr.mxu0 0.0
    %67 = vmatpush1.msra.mxu0 0.0
    %68 = vmatprep.subr.mxu0 0.0
    %69 = vmatpush1.msra.mxu0 0.0
    %70 = vmatprep.subr.mxu0 0.0
    %71 = vmatpush1.msra.mxu0 0.0
    %72 = vmatprep.subr.mxu0 0.0
    %73 = vmatpush1.msra.mxu0 0.0
    %74 = vmatprep.subr.mxu0 0.0
    %75 = vmatpush1.msra.mxu0 0.0
    %76 = vmatprep.subr.mxu0 0.0
    %77 = vmatpush1.msra.mxu0 0.0
    %78 = vmatprep.subr.mxu0 0.0
    %79 = vmatpush1.msra.mxu0 0.0
    %80 = vmatprep.subr.mxu0 0.0
    %81 = vmatpush1.msra.mxu0 0.0
    %82 = vmatprep.subr.mxu0 0.0
    %83 = vmatpush1.msra.mxu0 0.0
    %84 = vmatprep.subr.mxu0 0.0
    %85 = vmatpush1.msra.mxu0 0.0
    %86 = vmatprep.subr.mxu0 0.0
    %87 = vmatpush1.msra.mxu0 0.0
    %88 = vmatprep.subr.mxu0 0.0
    %89 = vmatpush1.msra.mxu0 0.0
    %90 = vmatprep.subr.mxu0 0.0
    %91 = vmatpush1.msra.mxu0 0.0
    %92 = vmatprep.subr.mxu0 0.0
    %93 = vmatpush1.msra.mxu0 0.0
    %94 = vmatprep.subr.mxu0 0.0
    %95 = vmatpush1.msra.mxu0 0.0
    %96 = vmatprep.subr.mxu0 0.0
    %97 = vmatpush1.msra.mxu0 0.0
    %98 = vmatprep.subr.mxu0 0.0
    %99 = vmatpush1.msra.mxu0 0.0
    %100 = vmatprep.subr.mxu0 0.0
    %101 = vmatpush1.msra.mxu0 0.0
    %102 = vmatprep.subr.mxu0 0.0
    %103 = vmatpush1.msra.mxu0 0.0
    %104 = vmatprep.subr.mxu0 0.0
    %105 = vmatpush1.msra.mxu0 0.0
    %106 = vmatprep.subr.mxu0 0.0
    %107 = vmatpush1.msra.mxu0 0.0
    %108 = vmatprep.subr.mxu0 0.0
    %109 = vmatpush1.msra.mxu0 0.0
    %110 = vmatprep.subr.mxu0 0.0
    %111 = vmatpush1.msra.mxu0 0.0
    %112 = vmatprep.subr.mxu0 0.0
    %113 = vmatpush1.msra.mxu0 0.0
    %114 = vmatprep.subr.mxu0 0.0
    %115 = vmatpush1.msra.mxu0 0.0
    %116 = vmatprep.subr.mxu0 0.0
    %117 = vmatpush1.msra.mxu0 0.0
    %118 = vmatprep.subr.mxu0 0.0
    %119 = vmatpush1.msra.mxu0 0.0
    %120 = vmatprep.mubr.f32.mxu0 0.0
    %121 = vmatmul.mubr.f32.gmra.mrb[0].mxu0 %v54
    %v122 = vpop.f32.mrb[0].mxu0
    %v123 = vadd.f32 %v50, %v122
    %v124 = vpop.f32.mrb[0].mxu0
    %125 = vdwg.mxu0
    %126 = vst [vmem:[%s3] sm:$0xff] %v123
    // Predicated region
    $region22: #{dummy_policy_forward.1} parent=1 // pred_check
      _
    $region23: #{dummy_policy_forward.1} parent=1 // pred_check_branch
      %128 = sbr.rel (0) target = $region25
    $region24: #{dummy_policy_forward.1} parent=1 // pred_region
      _
    $region25: #{dummy_policy_forward.1} parent=1 // pred_fallthru
      _
    // Predicated region
    $region26: #{dummy_policy_forward.1} parent=1 // pred_check
      _
    $region27: #{dummy_policy_forward.1} parent=1 // pred_check_branch
      %130 = sbr.rel (0) target = $region29
    $region28: #{dummy_policy_forward.1} parent=1 // pred_region
      _
    $region29: #{dummy_policy_forward.1} parent=1 // pred_fallthru
      _
    %131 = vsyncpa [#allocation3], 1
    %132 = vsyncpa [#allocation5], 1

</llo_original>
